<compile_context>
chip_gen: v7x
topology: tpu7x:2x2x1
jax: 0.10.0
libtpu: 0.0.40
codegen_flags: <defaults>
</compile_context>

<pallas_src>
import functools

import jax
import jax.numpy as jnp
from jax.experimental import pallas as pl
from jax.experimental.pallas import tpu as pltpu

_NEG = -1e30  # effectively -inf for padded class lanes (exp -> 0 in f32)


def _pn_kernel(x_ref,
               w1, b1, w2, b2, w3, b3,
               w4a, w4b, b4, w5, b5, w6p, b6p,
               o_ref):
    Bt, N, _ = x_ref.shape
    M = Bt * N
    Cpad = o_ref.shape[2]

    # ---- layer 1 (3 -> 64): K=3 contraction -> VPU broadcast FMAs, not the MXU
    x = x_ref[...].reshape(M, 3)                       # (M, 3) f32
    w1v = w1[...]                                      # (3, 64) f32
    h = (x[:, 0:1] * w1v[0:1, :]
         + x[:, 1:2] * w1v[1:2, :]
         + x[:, 2:3] * w1v[2:3, :]
         + b1[...])
    h = jnp.maximum(h, 0.0)                            # (M, 64) f32

    # ---- layers 2,3 (64 -> 128 -> 128): bf16 MXU matmuls, f32 accumulation
    h = jnp.dot(h.astype(jnp.bfloat16), w2[...],
                preferred_element_type=jnp.float32) + b2[...]
    h = jnp.maximum(h, 0.0)
    pf = jnp.dot(h.astype(jnp.bfloat16), w3[...],
                 preferred_element_type=jnp.float32) + b3[...]
    pf = jnp.maximum(pf, 0.0)                          # (M, 128) point features, f32

    # ---- per-point-cloud global max pool (torch.max over dim=1), in f32
    g = jnp.max(pf.reshape(Bt, N, 128), axis=1)        # (Bt, 128)

    # ---- refine layer on cat([pf, g.repeat(N)]): split-weight trick, no concat
    h4a = jnp.dot(pf.astype(jnp.bfloat16), w4a[...],
                  preferred_element_type=jnp.float32)                 # (M, 128)
    h4b = jnp.dot(g.astype(jnp.bfloat16), w4b[...],
                  preferred_element_type=jnp.float32)                 # (Bt, 128)
    h = h4a.reshape(Bt, N, 128) + h4b[:, None, :] + b4[...]
    h = jnp.maximum(h, 0.0).reshape(M, 128)

    # ---- refine layers 2,3
    h = jnp.dot(h.astype(jnp.bfloat16), w5[...],
                preferred_element_type=jnp.float32) + b5[...]
    h = jnp.maximum(h, 0.0)                            # (M, 64)
    logits = jnp.dot(h.astype(jnp.bfloat16), w6p[...],
                     preferred_element_type=jnp.float32) + b6p[...]   # (M, Cpad)

    # ---- log_softmax in f32 (padding lanes carry a -1e30 bias -> contribute 0)
    m = jnp.max(logits, axis=-1, keepdims=True)
    z = logits - m
    lse = jnp.log(jnp.sum(jnp.exp(z), axis=-1, keepdims=True))
    o_ref[...] = (z - lse).reshape(Bt, N, Cpad).astype(o_ref.dtype)


def _full_spec(shape):
    # whole (small) parameter lives in VMEM, same block for every grid step
    nd = len(shape)
    return pl.BlockSpec(shape, lambda b, _nd=nd: (0,) * _nd)


def _choose_bt(B, N, max_rows=2048):
    """Largest divisor of B whose Bt*N activation rows stay VMEM-friendly;
    prefer leaving >=2 grid steps (helps v7x's two TensorCores) whenever the
    per-step M stays >= 256 rows."""
    fitting = [d for d in range(1, B + 1) if B % d == 0 and d * N <= max_rows]
    if not fitting:
        return 1
    bt = max(fitting)
    for d in sorted(fitting, reverse=True):
        if d < bt and d * N >= 256 and (B // d) >= 2:
            return d
    return bt


@functools.partial(jax.jit, static_argnames=("num_classes",))
def pn_linear_forward(x, params, *, num_classes):
    B, N, _ = x.shape
    (w1, b1, w2, b2, w3, b3, w4a, w4b, b4, w5, b5, w6, b6) = params

    C = num_classes
    Cpad = ((C + 127) // 128) * 128            # lane-dense class dimension
    w6p = jnp.pad(w6, ((0, 0), (0, Cpad - C)))
    b6p = jnp.pad(b6, ((0, 0), (0, Cpad - C)), constant_values=_NEG)

    bf16 = jnp.bfloat16
    w2b, w3b = w2.astype(bf16), w3.astype(bf16)
    w4ab, w4bb = w4a.astype(bf16), w4b.astype(bf16)
    w5b, w6pb = w5.astype(bf16), w6p.astype(bf16)

    Bt = _choose_bt(B, N)

    grid_spec = pltpu.PrefetchScalarGridSpec(
        num_scalar_prefetch=0,
        grid=(B // Bt,),
        in_specs=[
            pl.BlockSpec((Bt, N, 3), lambda b: (b, 0, 0)),
            _full_spec(w1.shape), _full_spec(b1.shape),
            _full_spec(w2b.shape), _full_spec(b2.shape),
            _full_spec(w3b.shape), _full_spec(b3.shape),
            _full_spec(w4ab.shape), _full_spec(w4bb.shape), _full_spec(b4.shape),
            _full_spec(w5b.shape), _full_spec(b5.shape),
            _full_spec(w6pb.shape), _full_spec(b6p.shape),
        ],
        out_specs=pl.BlockSpec((Bt, N, Cpad), lambda b: (b, 0, 0)),
    )

    out_padded = pl.pallas_call(
        _pn_kernel,
        out_shape=jax.ShapeDtypeStruct((B, N, Cpad), jnp.float32),
        grid_spec=grid_spec,
        compiler_params=pltpu.CompilerParams(
            dimension_semantics=("parallel",),
            vmem_limit_bytes=64 * 1024 * 1024),
    )(x, w1, b1, w2b, b2, w3b, b3, w4ab, w4bb, b4, w5b, b5, w6pb, b6p)

    # drop the lane-padding back to the real class count
    return out_padded[:, :, :C]


def init_params(key, num_classes):
    """Deterministic synthetic weights matching the nn.Module shapes.

    PyTorch nn.Linear(in, out) has weight (out, in); we store (in, out)."""
    dims = [
        (3, 64), (64, 128), (128, 128),            # shared_mlp
        (256, 128), (128, 64), (64, num_classes)   # refine_mlp
    ]
    keys = jax.random.split(key, 2 * len(dims))
    ws, bs = [], []
    for i, (fin, fout) in enumerate(dims):
        bound = 1.0 / jnp.sqrt(fin)
        w = jax.random.uniform(keys[2 * i], (fin, fout), jnp.float32, -bound, bound)
        b = jax.random.uniform(keys[2 * i + 1], (1, fout), jnp.float32, -bound, bound)
        ws.append(w)
        bs.append(b)
    w1, w2, w3, w4, w5, w6 = ws
    b1, b2, b3, b4, b5, b6 = bs
    # split the 256-in refine weight into the point-feature half and global half
    w4a, w4b = w4[:128], w4[128:]
    return (w1, b1, w2, b2, w3, b3, w4a, w4b, b4, w5, b5, w6, b6)


def reference_forward(x, params):
    """Pure-JAX f32 reference mirroring the PyTorch module (for validation)."""
    (w1, b1, w2, b2, w3, b3, w4a, w4b, b4, w5, b5, w6, b6) = params
    h = jax.nn.relu(x @ w1 + b1)
    h = jax.nn.relu(h @ w2 + b2)
    pf = jax.nn.relu(h @ w3 + b3)                       # (B, N, 128)
    g = jnp.max(pf, axis=1, keepdims=True)              # (B, 1, 128)
    g = jnp.broadcast_to(g, pf.shape)                   # repeat(1, N, 1)
    cat = jnp.concatenate([pf, g], axis=-1)             # (B, N, 256)
    w4 = jnp.concatenate([w4a, w4b], axis=0)
    h = jax.nn.relu(cat @ w4 + b4)
    h = jax.nn.relu(h @ w5 + b5)
    logits = h @ w6 + b6
    return jax.nn.log_softmax(logits, axis=-1)


if __name__ == "__main__":
    num_classes = 4
    B, N = 2, 16

    key = jax.random.PRNGKey(0)
    kx, kp = jax.random.split(key)
    x = jax.random.normal(kx, (B, N, 3), dtype=jnp.float32)
    params = init_params(kp, num_classes)

    out = pn_linear_forward(x, params, num_classes=num_classes)
    out = jax.block_until_ready(out)

    ref = reference_forward(x, params)
    assert out.shape == (B, N, num_classes)
    # bf16 MXU matmuls (f32 accumulation) -> looser tolerance than a pure-f32 run
    assert jnp.allclose(out, ref, rtol=1e-1, atol=1e-1), "mismatch vs JAX reference"

    print("KERNEL_OK")
</pallas_src>

<mosaic_0001>
module attributes {stable_mosaic.version = 11 : i64} {
  func.func @_pn_kernel(%arg0: i32, %arg1: memref<2x16x3xf32, #tpu.memory_space<vmem>>, %arg2: memref<3x64xf32, #tpu.memory_space<vmem>>, %arg3: memref<1x64xf32, #tpu.memory_space<vmem>>, %arg4: memref<64x128xbf16, #tpu.memory_space<vmem>>, %arg5: memref<1x128xf32, #tpu.memory_space<vmem>>, %arg6: memref<128x128xbf16, #tpu.memory_space<vmem>>, %arg7: memref<1x128xf32, #tpu.memory_space<vmem>>, %arg8: memref<128x128xbf16, #tpu.memory_space<vmem>>, %arg9: memref<128x128xbf16, #tpu.memory_space<vmem>>, %arg10: memref<1x128xf32, #tpu.memory_space<vmem>>, %arg11: memref<128x64xbf16, #tpu.memory_space<vmem>>, %arg12: memref<1x64xf32, #tpu.memory_space<vmem>>, %arg13: memref<64x128xbf16, #tpu.memory_space<vmem>>, %arg14: memref<1x128xf32, #tpu.memory_space<vmem>>, %arg15: memref<2x16x128xf32, #tpu.memory_space<vmem>>) attributes {dimension_semantics = [#tpu.dimension_semantics<parallel>], iteration_bounds = array<i64: 1>, scalar_prefetch = 0 : i64, scratch_operands = 0 : i64, tpu.core_type = #tpu.core_type<tc>, window_params = [{transform_indices = @transform_0, window_bounds = array<i64: 2, 16, 3>}, {pipeline_mode = #tpu.pipeline_mode<synchronous>, transform_indices = @transform_1, window_bounds = array<i64: 3, 64>}, {pipeline_mode = #tpu.pipeline_mode<synchronous>, transform_indices = @transform_2, window_bounds = array<i64: 1, 64>}, {pipeline_mode = #tpu.pipeline_mode<synchronous>, transform_indices = @transform_3, window_bounds = array<i64: 64, 128>}, {pipeline_mode = #tpu.pipeline_mode<synchronous>, transform_indices = @transform_4, window_bounds = array<i64: 1, 128>}, {pipeline_mode = #tpu.pipeline_mode<synchronous>, transform_indices = @transform_5, window_bounds = array<i64: 128, 128>}, {pipeline_mode = #tpu.pipeline_mode<synchronous>, transform_indices = @transform_6, window_bounds = array<i64: 1, 128>}, {pipeline_mode = #tpu.pipeline_mode<synchronous>, transform_indices = @transform_7, window_bounds = array<i64: 128, 128>}, {pipeline_mode = #tpu.pipeline_mode<synchronous>, transform_indices = @transform_8, window_bounds = array<i64: 128, 128>}, {pipeline_mode = #tpu.pipeline_mode<synchronous>, transform_indices = @transform_9, window_bounds = array<i64: 1, 128>}, {pipeline_mode = #tpu.pipeline_mode<synchronous>, transform_indices = @transform_10, window_bounds = array<i64: 128, 64>}, {pipeline_mode = #tpu.pipeline_mode<synchronous>, transform_indices = @transform_11, window_bounds = array<i64: 1, 64>}, {pipeline_mode = #tpu.pipeline_mode<synchronous>, transform_indices = @transform_12, window_bounds = array<i64: 64, 128>}, {pipeline_mode = #tpu.pipeline_mode<synchronous>, transform_indices = @transform_13, window_bounds = array<i64: 1, 128>}, {transform_indices = @transform_14, window_bounds = array<i64: 2, 16, 128>}]} {
    %c0 = arith.constant 0 : index
    %c0_0 = arith.constant 0 : index
    %c0_1 = arith.constant 0 : index
    %0 = vector.load %arg1[%c0, %c0_0, %c0_1] : memref<2x16x3xf32, #tpu.memory_space<vmem>>, vector<2x16x3xf32>
    %1 = vector.shape_cast %0 : vector<2x16x3xf32> to vector<32x3xf32>
    %c0_2 = arith.constant 0 : index
    %c0_3 = arith.constant 0 : index
    %2 = vector.load %arg2[%c0_2, %c0_3] : memref<3x64xf32, #tpu.memory_space<vmem>>, vector<3x64xf32>
    %3 = vector.extract_strided_slice %1 {offsets = [0, 0], sizes = [32, 1], strides = [1, 1]} : vector<32x3xf32> to vector<32x1xf32>
    %4 = vector.extract_strided_slice %2 {offsets = [0, 0], sizes = [1, 64], strides = [1, 1]} : vector<3x64xf32> to vector<1x64xf32>
    %5 = vector.broadcast %3 : vector<32x1xf32> to vector<32x64xf32>
    %6 = vector.broadcast %4 : vector<1x64xf32> to vector<32x64xf32>
    %7 = arith.mulf %5, %6 : vector<32x64xf32>
    %8 = vector.extract_strided_slice %1 {offsets = [0, 1], sizes = [32, 1], strides = [1, 1]} : vector<32x3xf32> to vector<32x1xf32>
    %9 = vector.extract_strided_slice %2 {offsets = [1, 0], sizes = [1, 64], strides = [1, 1]} : vector<3x64xf32> to vector<1x64xf32>
    %10 = vector.broadcast %8 : vector<32x1xf32> to vector<32x64xf32>
    %11 = vector.broadcast %9 : vector<1x64xf32> to vector<32x64xf32>
    %12 = arith.mulf %10, %11 : vector<32x64xf32>
    %13 = arith.addf %7, %12 : vector<32x64xf32>
    %14 = vector.extract_strided_slice %1 {offsets = [0, 2], sizes = [32, 1], strides = [1, 1]} : vector<32x3xf32> to vector<32x1xf32>
    %15 = vector.extract_strided_slice %2 {offsets = [2, 0], sizes = [1, 64], strides = [1, 1]} : vector<3x64xf32> to vector<1x64xf32>
    %16 = vector.broadcast %14 : vector<32x1xf32> to vector<32x64xf32>
    %17 = vector.broadcast %15 : vector<1x64xf32> to vector<32x64xf32>
    %18 = arith.mulf %16, %17 : vector<32x64xf32>
    %19 = arith.addf %13, %18 : vector<32x64xf32>
    %c0_4 = arith.constant 0 : index
    %c0_5 = arith.constant 0 : index
    %20 = vector.load %arg3[%c0_4, %c0_5] : memref<1x64xf32, #tpu.memory_space<vmem>>, vector<1x64xf32>
    %21 = vector.broadcast %20 : vector<1x64xf32> to vector<32x64xf32>
    %22 = arith.addf %19, %21 : vector<32x64xf32>
    %cst = arith.constant 0.000000e+00 : f32
    %23 = vector.broadcast %cst : f32 to vector<32x64xf32>
    %24 = arith.maximumf %22, %23 : vector<32x64xf32>
    %25 = arith.truncf %24 : vector<32x64xf32> to vector<32x64xbf16>
    %c0_6 = arith.constant 0 : index
    %c0_7 = arith.constant 0 : index
    %26 = vector.load %arg4[%c0_6, %c0_7] : memref<64x128xbf16, #tpu.memory_space<vmem>>, vector<64x128xbf16>
    %cst_8 = arith.constant dense<0.000000e+00> : vector<32x128xf32>
    %27 = tpu.matmul %25, %26, %cst_8 {dimension_numbers = #tpu.dot_dimension_numbers<[1], [0], [0], [1], [0, 0, 1, 1], [], []>} : vector<32x64xbf16>, vector<64x128xbf16>, vector<32x128xf32> -> vector<32x128xf32>
    %c0_9 = arith.constant 0 : index
    %c0_10 = arith.constant 0 : index
    %28 = vector.load %arg5[%c0_9, %c0_10] : memref<1x128xf32, #tpu.memory_space<vmem>>, vector<1x128xf32>
    %29 = vector.broadcast %28 : vector<1x128xf32> to vector<32x128xf32>
    %30 = arith.addf %27, %29 : vector<32x128xf32>
    %cst_11 = arith.constant 0.000000e+00 : f32
    %31 = vector.broadcast %cst_11 : f32 to vector<32x128xf32>
    %32 = arith.maximumf %30, %31 : vector<32x128xf32>
    %33 = arith.truncf %32 : vector<32x128xf32> to vector<32x128xbf16>
    %c0_12 = arith.constant 0 : index
    %c0_13 = arith.constant 0 : index
    %34 = vector.load %arg6[%c0_12, %c0_13] : memref<128x128xbf16, #tpu.memory_space<vmem>>, vector<128x128xbf16>
    %cst_14 = arith.constant dense<0.000000e+00> : vector<32x128xf32>
    %35 = tpu.matmul %33, %34, %cst_14 {dimension_numbers = #tpu.dot_dimension_numbers<[1], [0], [0], [1], [0, 0, 1, 1], [], []>} : vector<32x128xbf16>, vector<128x128xbf16>, vector<32x128xf32> -> vector<32x128xf32>
    %c0_15 = arith.constant 0 : index
    %c0_16 = arith.constant 0 : index
    %36 = vector.load %arg7[%c0_15, %c0_16] : memref<1x128xf32, #tpu.memory_space<vmem>>, vector<1x128xf32>
    %37 = vector.broadcast %36 : vector<1x128xf32> to vector<32x128xf32>
    %38 = arith.addf %35, %37 : vector<32x128xf32>
    %cst_17 = arith.constant 0.000000e+00 : f32
    %39 = vector.broadcast %cst_17 : f32 to vector<32x128xf32>
    %40 = arith.maximumf %38, %39 : vector<32x128xf32>
    %41 = vector.shape_cast %40 : vector<32x128xf32> to vector<2x16x128xf32>
    %cst_18 = arith.constant dense<0xFF800000> : vector<2x128xf32>
    %42 = vector.multi_reduction <maximumf>, %41, %cst_18 [1] : vector<2x16x128xf32> to vector<2x128xf32>
    %43 = arith.truncf %40 : vector<32x128xf32> to vector<32x128xbf16>
    %c0_19 = arith.constant 0 : index
    %c0_20 = arith.constant 0 : index
    %44 = vector.load %arg8[%c0_19, %c0_20] : memref<128x128xbf16, #tpu.memory_space<vmem>>, vector<128x128xbf16>
    %cst_21 = arith.constant dense<0.000000e+00> : vector<32x128xf32>
    %45 = tpu.matmul %43, %44, %cst_21 {dimension_numbers = #tpu.dot_dimension_numbers<[1], [0], [0], [1], [0, 0, 1, 1], [], []>} : vector<32x128xbf16>, vector<128x128xbf16>, vector<32x128xf32> -> vector<32x128xf32>
    %46 = arith.truncf %42 : vector<2x128xf32> to vector<2x128xbf16>
    %c0_22 = arith.constant 0 : index
    %c0_23 = arith.constant 0 : index
    %47 = vector.load %arg9[%c0_22, %c0_23] : memref<128x128xbf16, #tpu.memory_space<vmem>>, vector<128x128xbf16>
    %cst_24 = arith.constant dense<0.000000e+00> : vector<2x128xf32>
    %48 = tpu.matmul %46, %47, %cst_24 {dimension_numbers = #tpu.dot_dimension_numbers<[1], [0], [0], [1], [0, 0, 1, 1], [], []>} : vector<2x128xbf16>, vector<128x128xbf16>, vector<2x128xf32> -> vector<2x128xf32>
    %49 = vector.shape_cast %45 : vector<32x128xf32> to vector<2x16x128xf32>
    %50 = vector.shape_cast %48 : vector<2x128xf32> to vector<2x1x128xf32>
    %51 = vector.broadcast %50 : vector<2x1x128xf32> to vector<2x16x128xf32>
    %52 = arith.addf %49, %51 : vector<2x16x128xf32>
    %c0_25 = arith.constant 0 : index
    %c0_26 = arith.constant 0 : index
    %53 = vector.load %arg10[%c0_25, %c0_26] : memref<1x128xf32, #tpu.memory_space<vmem>>, vector<1x128xf32>
    %54 = vector.shape_cast %53 : vector<1x128xf32> to vector<1x1x128xf32>
    %55 = vector.broadcast %54 : vector<1x1x128xf32> to vector<2x16x128xf32>
    %56 = arith.addf %52, %55 : vector<2x16x128xf32>
    %cst_27 = arith.constant 0.000000e+00 : f32
    %57 = vector.broadcast %cst_27 : f32 to vector<2x16x128xf32>
    %58 = arith.maximumf %56, %57 : vector<2x16x128xf32>
    %59 = vector.shape_cast %58 : vector<2x16x128xf32> to vector<32x128xf32>
    %60 = arith.truncf %59 : vector<32x128xf32> to vector<32x128xbf16>
    %c0_28 = arith.constant 0 : index
    %c0_29 = arith.constant 0 : index
    %61 = vector.load %arg11[%c0_28, %c0_29] : memref<128x64xbf16, #tpu.memory_space<vmem>>, vector<128x64xbf16>
    %cst_30 = arith.constant dense<0.000000e+00> : vector<32x64xf32>
    %62 = tpu.matmul %60, %61, %cst_30 {dimension_numbers = #tpu.dot_dimension_numbers<[1], [0], [0], [1], [0, 0, 1, 1], [], []>} : vector<32x128xbf16>, vector<128x64xbf16>, vector<32x64xf32> -> vector<32x64xf32>
    %c0_31 = arith.constant 0 : index
    %c0_32 = arith.constant 0 : index
    %63 = vector.load %arg12[%c0_31, %c0_32] : memref<1x64xf32, #tpu.memory_space<vmem>>, vector<1x64xf32>
    %64 = vector.broadcast %63 : vector<1x64xf32> to vector<32x64xf32>
    %65 = arith.addf %62, %64 : vector<32x64xf32>
    %cst_33 = arith.constant 0.000000e+00 : f32
    %66 = vector.broadcast %cst_33 : f32 to vector<32x64xf32>
    %67 = arith.maximumf %65, %66 : vector<32x64xf32>
    %68 = arith.truncf %67 : vector<32x64xf32> to vector<32x64xbf16>
    %c0_34 = arith.constant 0 : index
    %c0_35 = arith.constant 0 : index
    %69 = vector.load %arg13[%c0_34, %c0_35] : memref<64x128xbf16, #tpu.memory_space<vmem>>, vector<64x128xbf16>
    %cst_36 = arith.constant dense<0.000000e+00> : vector<32x128xf32>
    %70 = tpu.matmul %68, %69, %cst_36 {dimension_numbers = #tpu.dot_dimension_numbers<[1], [0], [0], [1], [0, 0, 1, 1], [], []>} : vector<32x64xbf16>, vector<64x128xbf16>, vector<32x128xf32> -> vector<32x128xf32>
    %c0_37 = arith.constant 0 : index
    %c0_38 = arith.constant 0 : index
    %71 = vector.load %arg14[%c0_37, %c0_38] : memref<1x128xf32, #tpu.memory_space<vmem>>, vector<1x128xf32>
    %72 = vector.broadcast %71 : vector<1x128xf32> to vector<32x128xf32>
    %73 = arith.addf %70, %72 : vector<32x128xf32>
    %cst_39 = arith.constant dense<0xFF800000> : vector<32xf32>
    %74 = vector.multi_reduction <maximumf>, %73, %cst_39 [1] : vector<32x128xf32> to vector<32xf32>
    %75 = vector.shape_cast %74 : vector<32xf32> to vector<32x1xf32>
    %76 = vector.broadcast %75 : vector<32x1xf32> to vector<32x128xf32>
    %77 = arith.subf %73, %76 : vector<32x128xf32>
    %78 = math.exp %77 : vector<32x128xf32>
    %cst_40 = arith.constant dense<0.000000e+00> : vector<32xf32>
    %79 = vector.multi_reduction <add>, %78, %cst_40 [1] : vector<32x128xf32> to vector<32xf32>
    %80 = vector.shape_cast %79 : vector<32xf32> to vector<32x1xf32>
    %81 = math.log %80 : vector<32x1xf32>
    %82 = vector.broadcast %81 : vector<32x1xf32> to vector<32x128xf32>
    %83 = arith.subf %77, %82 : vector<32x128xf32>
    %84 = vector.shape_cast %83 : vector<32x128xf32> to vector<2x16x128xf32>
    %c0_41 = arith.constant 0 : index
    %c0_42 = arith.constant 0 : index
    %c0_43 = arith.constant 0 : index
    %85 = vector.load %arg15[%c0_41, %c0_42, %c0_43] : memref<2x16x128xf32, #tpu.memory_space<vmem>>, vector<2x16x128xf32>
    tpu.vector_store %arg15[%c0_41, %c0_42, %c0_43], %84 {strides = array<i32>} : memref<2x16x128xf32, #tpu.memory_space<vmem>>, vector<2x16x128xf32>,
    return
  }
  func.func @transform_0(%arg0: i32) -> (i32, i32, i32) {
    %c0_i32 = arith.constant 0 : i32
    %c0_i32_0 = arith.constant 0 : i32
    %c0_i32_1 = arith.constant 0 : i32
    return %arg0, %c0_i32, %c0_i32_0 : i32, i32, i32
  }
  func.func @transform_1(%arg0: i32) -> (i32, i32) {
    %c0_i32 = arith.constant 0 : i32
    %c0_i32_0 = arith.constant 0 : i32
    %c0_i32_1 = arith.constant 0 : i32
    return %c0_i32, %c0_i32_0 : i32, i32
  }
  func.func @transform_2(%arg0: i32) -> (i32, i32) {
    %c0_i32 = arith.constant 0 : i32
    %c0_i32_0 = arith.constant 0 : i32
    %c0_i32_1 = arith.constant 0 : i32
    return %c0_i32, %c0_i32_0 : i32, i32
  }
  func.func @transform_3(%arg0: i32) -> (i32, i32) {
    %c0_i32 = arith.constant 0 : i32
    %c0_i32_0 = arith.constant 0 : i32
    %c0_i32_1 = arith.constant 0 : i32
    return %c0_i32, %c0_i32_0 : i32, i32
  }
  func.func @transform_4(%arg0: i32) -> (i32, i32) {
    %c0_i32 = arith.constant 0 : i32
    %c0_i32_0 = arith.constant 0 : i32
    %c0_i32_1 = arith.constant 0 : i32
    return %c0_i32, %c0_i32_0 : i32, i32
  }
  func.func @transform_5(%arg0: i32) -> (i32, i32) {
    %c0_i32 = arith.constant 0 : i32
    %c0_i32_0 = arith.constant 0 : i32
    %c0_i32_1 = arith.constant 0 : i32
    return %c0_i32, %c0_i32_0 : i32, i32
  }
  func.func @transform_6(%arg0: i32) -> (i32, i32) {
    %c0_i32 = arith.constant 0 : i32
    %c0_i32_0 = arith.constant 0 : i32
    %c0_i32_1 = arith.constant 0 : i32
    return %c0_i32, %c0_i32_0 : i32, i32
  }
  func.func @transform_7(%arg0: i32) -> (i32, i32) {
    %c0_i32 = arith.constant 0 : i32
    %c0_i32_0 = arith.constant 0 : i32
    %c0_i32_1 = arith.constant 0 : i32
    return %c0_i32, %c0_i32_0 : i32, i32
  }
  func.func @transform_8(%arg0: i32) -> (i32, i32) {
    %c0_i32 = arith.constant 0 : i32
    %c0_i32_0 = arith.constant 0 : i32
    %c0_i32_1 = arith.constant 0 : i32
    return %c0_i32, %c0_i32_0 : i32, i32
  }
  func.func @transform_9(%arg0: i32) -> (i32, i32) {
    %c0_i32 = arith.constant 0 : i32
    %c0_i32_0 = arith.constant 0 : i32
    %c0_i32_1 = arith.constant 0 : i32
    return %c0_i32, %c0_i32_0 : i32, i32
  }
  func.func @transform_10(%arg0: i32) -> (i32, i32) {
    %c0_i32 = arith.constant 0 : i32
    %c0_i32_0 = arith.constant 0 : i32
    %c0_i32_1 = arith.constant 0 : i32
    return %c0_i32, %c0_i32_0 : i32, i32
  }
  func.func @transform_11(%arg0: i32) -> (i32, i32) {
    %c0_i32 = arith.constant 0 : i32
    %c0_i32_0 = arith.constant 0 : i32
    %c0_i32_1 = arith.constant 0 : i32
    return %c0_i32, %c0_i32_0 : i32, i32
  }
  func.func @transform_12(%arg0: i32) -> (i32, i32) {
    %c0_i32 = arith.constant 0 : i32
    %c0_i32_0 = arith.constant 0 : i32
    %c0_i32_1 = arith.constant 0 : i32
    return %c0_i32, %c0_i32_0 : i32, i32
  }
  func.func @transform_13(%arg0: i32) -> (i32, i32) {
    %c0_i32 = arith.constant 0 : i32
    %c0_i32_0 = arith.constant 0 : i32
    %c0_i32_1 = arith.constant 0 : i32
    return %c0_i32, %c0_i32_0 : i32, i32
  }
  func.func @transform_14(%arg0: i32) -> (i32, i32, i32) {
    %c0_i32 = arith.constant 0 : i32
    %c0_i32_0 = arith.constant 0 : i32
    %c0_i32_1 = arith.constant 0 : i32
    return %arg0, %c0_i32, %c0_i32_0 : i32, i32, i32
  }
}

</mosaic_0001>

<llo_original>
// kernel: pn_linear_forward.1
$region0: #{pn_linear_forward.1}
  #allocation0 [shape = 'u32[]', space=smem, size = 0x4, offset = 0x4, fixed_abs, tag = 'smem constant byte address 0x4 - core index']
  #allocation1 [shape = 'u32[144,128]{1,0:T(1,128)}', space=vmem, size = 0x12000, scoped, tag = 'internal scratch']
  %s0 = inlined_call_operand.hbm [shape: f32[2,16,3], index: 0, kind: input, shape index: {}]
  %s1 = inlined_call_operand.hbm [shape: f32[3,64], index: 1, kind: input, shape index: {}]
  %s2 = inlined_call_operand.hbm [shape: f32[1,64], index: 2, kind: input, shape index: {}]
  %s3 = inlined_call_operand.hbm [shape: bf16[64,128], index: 3, kind: input, shape index: {}]
  %s4 = inlined_call_operand.hbm [shape: f32[1,128], index: 4, kind: input, shape index: {}]
  %s5 = inlined_call_operand.hbm [shape: bf16[128,128], index: 5, kind: input, shape index: {}]
  %s6 = inlined_call_operand.hbm [shape: f32[1,128], index: 6, kind: input, shape index: {}]
  %s7 = inlined_call_operand.hbm [shape: bf16[128,128], index: 7, kind: input, shape index: {}]
  %s8 = inlined_call_operand.hbm [shape: bf16[128,128], index: 8, kind: input, shape index: {}]
  %s9 = inlined_call_operand.hbm [shape: f32[1,128], index: 9, kind: input, shape index: {}]
  %s10 = inlined_call_operand.hbm [shape: bf16[128,64], index: 10, kind: input, shape index: {}]
  %s11 = inlined_call_operand.hbm [shape: f32[1,64], index: 11, kind: input, shape index: {}]
  %s12 = inlined_call_operand.hbm [shape: bf16[64,128], index: 12, kind: input, shape index: {}]
  %s13 = inlined_call_operand.hbm [shape: f32[1,128], index: 13, kind: input, shape index: {}]
  %s14 = inlined_call_operand.hbm [shape: f32[2,16,128], index: 14, kind: output, shape index: {}]
  %s15 = sld [smem:[#allocation0]]
  $region122: #{pn_linear_forward.1} parent=0
    _
  %s17 = ssub.s32 1, %s15
  %s18 = scalar_select 0, %s17, %s15
  $region1: #{pn_linear_forward.1} parent=0
    #allocation2 [shape = 'u8[16384]{0}', space=vmem, size = 0x4000, scoped, tag = 'input window, operand 0, single buffered']
    #allocation3 [shape = 's32[1]{0}', space=sflag, size = 0x4, scoped, tag = 'scoped memory for pn_linear_forward.1']
    #allocation4 [shape = 's32[1]{0}', space=sflag, size = 0x4, scoped, tag = 'scoped memory for pn_linear_forward.1']
    #allocation5 [shape = 'u8[2048]{0}', space=vmem, size = 0x800, scoped, tag = 'input window, operand 1, single buffered']
    #allocation6 [shape = 's32[1]{0}', space=sflag, size = 0x4, scoped, tag = 'scoped memory for pn_linear_forward.1']
    #allocation7 [shape = 'u8[512]{0}', space=vmem, size = 0x400, scoped, tag = 'input window, operand 2, single buffered']
    #allocation8 [shape = 'u8[16384]{0}', space=vmem, size = 0x4000, scoped, tag = 'input window, operand 3, single buffered']
    #allocation9 [shape = 's32[1]{0}', space=sflag, size = 0x4, scoped, tag = 'scoped memory for pn_linear_forward.1']
    #allocation10 [shape = 'u8[512]{0}', space=vmem, size = 0x400, scoped, tag = 'input window, operand 4, single buffered']
    #allocation11 [shape = 'u8[32768]{0}', space=vmem, size = 0x8000, scoped, tag = 'input window, operand 5, single buffered']
    #allocation12 [shape = 's32[1]{0}', space=sflag, size = 0x4, scoped, tag = 'scoped memory for pn_linear_forward.1']
    #allocation13 [shape = 'u8[512]{0}', space=vmem, size = 0x400, scoped, tag = 'input window, operand 6, single buffered']
    #allocation14 [shape = 'u8[32768]{0}', space=vmem, size = 0x8000, scoped, tag = 'input window, operand 7, single buffered']
    #allocation15 [shape = 's32[1]{0}', space=sflag, size = 0x4, scoped, tag = 'scoped memory for pn_linear_forward.1']
    #allocation16 [shape = 'u8[32768]{0}', space=vmem, size = 0x8000, scoped, tag = 'input window, operand 8, single buffered']
    #allocation17 [shape = 'u8[512]{0}', space=vmem, size = 0x400, scoped, tag = 'input window, operand 9, single buffered']
    #allocation18 [shape = 's32[1]{0}', space=sflag, size = 0x4, scoped, tag = 'scoped memory for pn_linear_forward.1']
    #allocation19 [shape = 'u8[32768]{0}', space=vmem, size = 0x8000, scoped, tag = 'input window, operand 10, single buffered']
    #allocation20 [shape = 'u8[512]{0}', space=vmem, size = 0x400, scoped, tag = 'input window, operand 11, single buffered']
    #allocation21 [shape = 's32[1]{0}', space=sflag, size = 0x4, scoped, tag = 'scoped memory for pn_linear_forward.1']
    #allocation22 [shape = 'u8[16384]{0}', space=vmem, size = 0x4000, scoped, tag = 'input window, operand 12, single buffered']
    #allocation23 [shape = 'u8[512]{0}', space=vmem, size = 0x400, scoped, tag = 'input window, operand 13, single buffered']
    #allocation24 [shape = 's32[1]{0}', space=sflag, size = 0x4, scoped, tag = 'scoped memory for pn_linear_forward.1']
    #allocation25 [shape = 'u8[16384]{0}', space=vmem, size = 0x4000, scoped, tag = 'output window, operand 0, single buffered']
    %19 = vsyncpa [#allocation3], 0
    %20 = vsyncpa [#allocation6], 0
    %21 = vsyncpa [#allocation9], 0
    %22 = vsyncpa [#allocation12], 0
    %23 = vsyncpa [#allocation15], 0
    %24 = vsyncpa [#allocation18], 0
    %25 = vsyncpa [#allocation21], 0
    %26 = vsyncpa [#allocation24], 0
    %27 = vsyncpa [#allocation4], 0
    // Predicated region
    $region2: #{pn_linear_forward.1} parent=1 // pred_check
      _
    $region3: #{pn_linear_forward.1} parent=1 // pred_check_branch
      %29 = sbr.rel (0) target = $region5
    $region4: #{pn_linear_forward.1} parent=1 // pred_region
      %s31 = ssub.s32 512, 512
      %32 = vsyncadd [#allocation3], %s31
      %s33 = sshll.u32 [#allocation2], 4
      %s34 = int_to_ptr.vmem [resolvable:$true] %s33
      %39 = dma.hbm_to_vmem [thread:$0]  %s0, 512, %s34, [#allocation3], 128, 128, 8
    $region5: #{pn_linear_forward.1} parent=1 // pred_fallthru
      _
    // Predicated region
    $region6: #{pn_linear_forward.1} parent=1 // pred_check
      _
    $region7: #{pn_linear_forward.1} parent=1 // pred_check_branch
      %41 = sbr.rel (0) target = $region9
    $region8: #{pn_linear_forward.1} parent=1 // pred_region
      %s43 = ssub.s32 64, 64
      %44 = vsyncadd [#allocation6], %s43
      %s46 = sshll.u32 [#allocation5], 4
      %s47 = int_to_ptr.vmem [resolvable:$true] %s46
      %49 = dma.hbm_to_vmem [thread:$0]  %s1, 64, %s47, [#allocation6]
    $region9: #{pn_linear_forward.1} parent=1 // pred_fallthru
      _
    // Predicated region
    $region10: #{pn_linear_forward.1} parent=1 // pred_check
      _
    $region11: #{pn_linear_forward.1} parent=1 // pred_check_branch
      %51 = sbr.rel (0) target = $region13
    $region12: #{pn_linear_forward.1} parent=1 // pred_region
      %s53 = ssub.s32 16, 16
      %54 = vsyncadd [#allocation6], %s53
      %s56 = sshll.u32 [#allocation7], 4
      %s57 = int_to_ptr.vmem [resolvable:$true] %s56
      %59 = dma.hbm_to_vmem [thread:$0]  %s2, 16, %s57, [#allocation6]
    $region13: #{pn_linear_forward.1} parent=1 // pred_fallthru
      _
    // Predicated region
    $region14: #{pn_linear_forward.1} parent=1 // pred_check
      _
    $region15: #{pn_linear_forward.1} parent=1 // pred_check_branch
      %61 = sbr.rel (0) target = $region17
    $region16: #{pn_linear_forward.1} parent=1 // pred_region
      %s63 = ssub.s32 512, 512
      %64 = vsyncadd [#allocation9], %s63
      %s65 = sshll.u32 [#allocation8], 4
      %s66 = int_to_ptr.vmem [resolvable:$true] %s65
      %71 = dma.hbm_to_vmem [thread:$0]  %s3, 512, %s66, [#allocation9], 64, 64, 4
    $region17: #{pn_linear_forward.1} parent=1 // pred_fallthru
      _
    // Predicated region
    $region18: #{pn_linear_forward.1} parent=1 // pred_check
      _
    $region19: #{pn_linear_forward.1} parent=1 // pred_check_branch
      %73 = sbr.rel (0) target = $region21
    $region20: #{pn_linear_forward.1} parent=1 // pred_region
      %s75 = ssub.s32 16, 16
      %76 = vsyncadd [#allocation9], %s75
      %s78 = sshll.u32 [#allocation10], 4
      %s79 = int_to_ptr.vmem [resolvable:$true] %s78
      %81 = dma.hbm_to_vmem [thread:$0]  %s4, 16, %s79, [#allocation9]
    $region21: #{pn_linear_forward.1} parent=1 // pred_fallthru
      _
    // Predicated region
    $region22: #{pn_linear_forward.1} parent=1 // pred_check
      _
    $region23: #{pn_linear_forward.1} parent=1 // pred_check_branch
      %83 = sbr.rel (0) target = $region25
    $region24: #{pn_linear_forward.1} parent=1 // pred_region
      %s85 = ssub.s32 1024, 1024
      %86 = vsyncadd [#allocation12], %s85
      %s87 = sshll.u32 [#allocation11], 4
      %s88 = int_to_ptr.vmem [resolvable:$true] %s87
      %93 = dma.hbm_to_vmem [thread:$0]  %s5, 1024, %s88, [#allocation12], 64, 64, 4
    $region25: #{pn_linear_forward.1} parent=1 // pred_fallthru
      _
    // Predicated region
    $region26: #{pn_linear_forward.1} parent=1 // pred_check
      _
    $region27: #{pn_linear_forward.1} parent=1 // pred_check_branch
      %95 = sbr.rel (0) target = $region29
    $region28: #{pn_linear_forward.1} parent=1 // pred_region
      %s97 = ssub.s32 16, 16
      %98 = vsyncadd [#allocation12], %s97
      %s100 = sshll.u32 [#allocation13], 4
      %s101 = int_to_ptr.vmem [resolvable:$true] %s100
      %103 = dma.hbm_to_vmem [thread:$0]  %s6, 16, %s101, [#allocation12]
    $region29: #{pn_linear_forward.1} parent=1 // pred_fallthru
      _
    // Predicated region
    $region30: #{pn_linear_forward.1} parent=1 // pred_check
      _
    $region31: #{pn_linear_forward.1} parent=1 // pred_check_branch
      %105 = sbr.rel (0) target = $region33
    $region32: #{pn_linear_forward.1} parent=1 // pred_region
      %s107 = ssub.s32 1024, 1024
      %108 = vsyncadd [#allocation15], %s107
      %s109 = sshll.u32 [#allocation14], 4
      %s110 = int_to_ptr.vmem [resolvable:$true] %s109
      %115 = dma.hbm_to_vmem [thread:$0]  %s7, 1024, %s110, [#allocation15], 64, 64, 4
    $region33: #{pn_linear_forward.1} parent=1 // pred_fallthru
      _
    // Predicated region
    $region34: #{pn_linear_forward.1} parent=1 // pred_check
      _
    $region35: #{pn_linear_forward.1} parent=1 // pred_check_branch
      %117 = sbr.rel (0) target = $region37
    $region36: #{pn_linear_forward.1} parent=1 // pred_region
      %s119 = ssub.s32 1024, 1024
      %120 = vsyncadd [#allocation15], %s119
      %s121 = sshll.u32 [#allocation16], 4
      %s122 = int_to_ptr.vmem [resolvable:$true] %s121
      %127 = dma.hbm_to_vmem [thread:$0]  %s8, 1024, %s122, [#allocation15], 64, 64, 4
    $region37: #{pn_linear_forward.1} parent=1 // pred_fallthru
      _
    // Predicated region
    $region38: #{pn_linear_forward.1} parent=1 // pred_check
      _
    $region39: #{pn_linear_forward.1} parent=1 // pred_check_branch
      %129 = sbr.rel (0) target = $region41
    $region40: #{pn_linear_forward.1} parent=1 // pred_region
      %s131 = ssub.s32 16, 16
      %132 = vsyncadd [#allocation18], %s131
      %s134 = sshll.u32 [#allocation17], 4
      %s135 = int_to_ptr.vmem [resolvable:$true] %s134
      %137 = dma.hbm_to_vmem [thread:$0]  %s9, 16, %s135, [#allocation18]
    $region41: #{pn_linear_forward.1} parent=1 // pred_fallthru
      _
    // Predicated region
    $region42: #{pn_linear_forward.1} parent=1 // pred_check
      _
    $region43: #{pn_linear_forward.1} parent=1 // pred_check_branch
      %139 = sbr.rel (0) target = $region45
    $region44: #{pn_linear_forward.1} parent=1 // pred_region
      %s141 = ssub.s32 1024, 1024
      %142 = vsyncadd [#allocation18], %s141
      %s143 = sshll.u32 [#allocation19], 4
      %s144 = int_to_ptr.vmem [resolvable:$true] %s143
      %149 = dma.hbm_to_vmem [thread:$0]  %s10, 1024, %s144, [#allocation18], 64, 64, 4
    $region45: #{pn_linear_forward.1} parent=1 // pred_fallthru
      _
    // Predicated region
    $region46: #{pn_linear_forward.1} parent=1 // pred_check
      _
    $region47: #{pn_linear_forward.1} parent=1 // pred_check_branch
      %151 = sbr.rel (0) target = $region49
    $region48: #{pn_linear_forward.1} parent=1 // pred_region
      %s153 = ssub.s32 16, 16
      %154 = vsyncadd [#allocation21], %s153
      %s156 = sshll.u32 [#allocation20], 4
      %s157 = int_to_ptr.vmem [resolvable:$true] %s156
      %159 = dma.hbm_to_vmem [thread:$0]  %s11, 16, %s157, [#allocation21]
    $region49: #{pn_linear_forward.1} parent=1 // pred_fallthru
      _
    // Predicated region
    $region50: #{pn_linear_forward.1} parent=1 // pred_check
      _
    $region51: #{pn_linear_forward.1} parent=1 // pred_check_branch
      %161 = sbr.rel (0) target = $region53
    $region52: #{pn_linear_forward.1} parent=1 // pred_region
      %s163 = ssub.s32 512, 512
      %164 = vsyncadd [#allocation21], %s163
      %s165 = sshll.u32 [#allocation22], 4
      %s166 = int_to_ptr.vmem [resolvable:$true] %s165
      %171 = dma.hbm_to_vmem [thread:$0]  %s12, 512, %s166, [#allocation21], 64, 64, 4
    $region53: #{pn_linear_forward.1} parent=1 // pred_fallthru
      _
    // Predicated region
    $region54: #{pn_linear_forward.1} parent=1 // pred_check
      _
    $region55: #{pn_linear_forward.1} parent=1 // pred_check_branch
      %173 = sbr.rel (0) target = $region57
    $region56: #{pn_linear_forward.1} parent=1 // pred_region
      %s175 = ssub.s32 16, 16
      %176 = vsyncadd [#allocation24], %s175
      %s178 = sshll.u32 [#allocation23], 4
      %s179 = int_to_ptr.vmem [resolvable:$true] %s178
      %181 = dma.hbm_to_vmem [thread:$0]  %s13, 16, %s179, [#allocation24]
    $region57: #{pn_linear_forward.1} parent=1 // pred_fallthru
      _
    // Predicated region
    $region58: #{pn_linear_forward.1} parent=1 // pred_check
      _
    $region59: #{pn_linear_forward.1} parent=1 // pred_check_branch
      %183 = sbr.rel (0) target = $region61
    $region60: #{pn_linear_forward.1} parent=1 // pred_region
      %184 = dma.done [#allocation3], 512
    $region61: #{pn_linear_forward.1} parent=1 // pred_fallthru
      _
    // Predicated region
    $region62: #{pn_linear_forward.1} parent=1 // pred_check
      _
    $region63: #{pn_linear_forward.1} parent=1 // pred_check_branch
      %186 = sbr.rel (0) target = $region65
    $region64: #{pn_linear_forward.1} parent=1 // pred_region
      %187 = dma.done [#allocation6], 64
    $region65: #{pn_linear_forward.1} parent=1 // pred_fallthru
      _
    // Predicated region
    $region66: #{pn_linear_forward.1} parent=1 // pred_check
      _
    $region67: #{pn_linear_forward.1} parent=1 // pred_check_branch
      %189 = sbr.rel (0) target = $region69
    $region68: #{pn_linear_forward.1} parent=1 // pred_region
      %190 = dma.done [#allocation6], 16
    $region69: #{pn_linear_forward.1} parent=1 // pred_fallthru
      _
    // Predicated region
    $region70: #{pn_linear_forward.1} parent=1 // pred_check
      _
    $region71: #{pn_linear_forward.1} parent=1 // pred_check_branch
      %192 = sbr.rel (0) target = $region73
    $region72: #{pn_linear_forward.1} parent=1 // pred_region
      %193 = dma.done [#allocation9], 512
    $region73: #{pn_linear_forward.1} parent=1 // pred_fallthru
      _
    // Predicated region
    $region74: #{pn_linear_forward.1} parent=1 // pred_check
      _
    $region75: #{pn_linear_forward.1} parent=1 // pred_check_branch
      %195 = sbr.rel (0) target = $region77
    $region76: #{pn_linear_forward.1} parent=1 // pred_region
      %196 = dma.done [#allocation9], 16
    $region77: #{pn_linear_forward.1} parent=1 // pred_fallthru
      _
    // Predicated region
    $region78: #{pn_linear_forward.1} parent=1 // pred_check
      _
    $region79: #{pn_linear_forward.1} parent=1 // pred_check_branch
      %198 = sbr.rel (0) target = $region81
    $region80: #{pn_linear_forward.1} parent=1 // pred_region
      %199 = dma.done [#allocation12], 1024
    $region81: #{pn_linear_forward.1} parent=1 // pred_fallthru
      _
    // Predicated region
    $region82: #{pn_linear_forward.1} parent=1 // pred_check
      _
    $region83: #{pn_linear_forward.1} parent=1 // pred_check_branch
      %201 = sbr.rel (0) target = $region85
    $region84: #{pn_linear_forward.1} parent=1 // pred_region
      %202 = dma.done [#allocation12], 16
    $region85: #{pn_linear_forward.1} parent=1 // pred_fallthru
      _
    // Predicated region
    $region86: #{pn_linear_forward.1} parent=1 // pred_check
      _
    $region87: #{pn_linear_forward.1} parent=1 // pred_check_branch
      %204 = sbr.rel (0) target = $region89
    $region88: #{pn_linear_forward.1} parent=1 // pred_region
      %205 = dma.done [#allocation15], 1024
    $region89: #{pn_linear_forward.1} parent=1 // pred_fallthru
      _
    // Predicated region
    $region90: #{pn_linear_forward.1} parent=1 // pred_check
      _
    $region91: #{pn_linear_forward.1} parent=1 // pred_check_branch
      %207 = sbr.rel (0) target = $region93
    $region92: #{pn_linear_forward.1} parent=1 // pred_region
      %208 = dma.done [#allocation15], 1024
    $region93: #{pn_linear_forward.1} parent=1 // pred_fallthru
      _
    // Predicated region
    $region94: #{pn_linear_forward.1} parent=1 // pred_check
      _
    $region95: #{pn_linear_forward.1} parent=1 // pred_check_branch
      %210 = sbr.rel (0) target = $region97
    $region96: #{pn_linear_forward.1} parent=1 // pred_region
      %211 = dma.done [#allocation18], 16
    $region97: #{pn_linear_forward.1} parent=1 // pred_fallthru
      _
    // Predicated region
    $region98: #{pn_linear_forward.1} parent=1 // pred_check
      _
    $region99: #{pn_linear_forward.1} parent=1 // pred_check_branch
      %213 = sbr.rel (0) target = $region101
    $region100: #{pn_linear_forward.1} parent=1 // pred_region
      %214 = dma.done [#allocation18], 1024
    $region101: #{pn_linear_forward.1} parent=1 // pred_fallthru
      _
    // Predicated region
    $region102: #{pn_linear_forward.1} parent=1 // pred_check
      _
    $region103: #{pn_linear_forward.1} parent=1 // pred_check_branch
      %216 = sbr.rel (0) target = $region105
    $region104: #{pn_linear_forward.1} parent=1 // pred_region
      %217 = dma.done [#allocation21], 16
    $region105: #{pn_linear_forward.1} parent=1 // pred_fallthru
      _
    // Predicated region
    $region106: #{pn_linear_forward.1} parent=1 // pred_check
      _
    $region107: #{pn_linear_forward.1} parent=1 // pred_check_branch
      %219 = sbr.rel (0) target = $region109
    $region108: #{pn_linear_forward.1} parent=1 // pred_region
      %220 = dma.done [#allocation21], 512
    $region109: #{pn_linear_forward.1} parent=1 // pred_fallthru
      _
    // Predicated region
    $region110: #{pn_linear_forward.1} parent=1 // pred_check
      _
    $region111: #{pn_linear_forward.1} parent=1 // pred_check_branch
      %222 = sbr.rel (0) target = $region113
    $region112: #{pn_linear_forward.1} parent=1 // pred_region
      %223 = dma.done [#allocation24], 16
    $region113: #{pn_linear_forward.1} parent=1 // pred_fallthru
      _
    %v225 = vld [vmem:[#allocation2] sm:$0xff]
    %v226 = vld [vmem:[#allocation2 + $0x8] sm:$0xff]
    %v227 = vld [vmem:[#allocation2 + $0x10] sm:$0xff]
    %v228 = vld [vmem:[#allocation2 + $0x18] sm:$0xff]
    %v229 = vld [vmem:[#allocation5] sm:$0x7]
    %231 = vset.pattern.permute.xlu0 0
    %232 = vperm.xlu0 %231, %v225
    %v233 = vpop.permute.xlu0 %232
    %236 = vset.pattern.permute.xlu0 0
    %237 = vperm.xlu0 %236, %v226
    %v238 = vpop.permute.xlu0 %237
    %241 = vset.pattern.permute.xlu0 0
    %242 = vperm.xlu0 %241, %v227
    %v243 = vpop.permute.xlu0 %242
    %246 = vset.pattern.permute.xlu0 0
    %247 = vperm.xlu0 %246, %v228
    %v248 = vpop.permute.xlu0 %247
    %v250 = vlaneseq
    %v251 = vshrl.u32 %v250, 7
    %v252 = vsub.s32 0, %v251
    %v253 = vrot.slane %v229, %v252
    %v254 = vmul.f32 %v233, %v253
    %v255 = vmul.f32 %v238, %v253
    %v256 = vmul.f32 %v243, %v253
    %v257 = vmul.f32 %v248, %v253
    %258 = vset.pattern.permute.xlu0 1
    %259 = vperm.xlu0 %258, %v225
    %v260 = vpop.permute.xlu0 %259
    %262 = vset.pattern.permute.xlu0 1
    %263 = vperm.xlu0 %262, %v226
    %v264 = vpop.permute.xlu0 %263
    %266 = vset.pattern.permute.xlu0 1
    %267 = vperm.xlu0 %266, %v227
    %v268 = vpop.permute.xlu0 %267
    %270 = vset.pattern.permute.xlu0 1
    %271 = vperm.xlu0 %270, %v228
    %v272 = vpop.permute.xlu0 %271
    %v274 = vlaneseq
    %v275 = vshrl.u32 %v274, 7
    %v276 = vsub.s32 1, %v275
    %v277 = vrot.slane %v229, %v276
    %v278 = vmul.f32 %v260, %v277
    %v279 = vmul.f32 %v264, %v277
    %v280 = vmul.f32 %v268, %v277
    %v281 = vmul.f32 %v272, %v277
    %v282 = vadd.f32 %v254, %v278
    %v283 = vadd.f32 %v255, %v279
    %v284 = vadd.f32 %v256, %v280
    %v285 = vadd.f32 %v257, %v281
    %286 = vset.pattern.permute.xlu0 2
    %287 = vperm.xlu0 %286, %v225
    %v288 = vpop.permute.xlu0 %287
    %290 = vset.pattern.permute.xlu0 2
    %291 = vperm.xlu0 %290, %v226
    %v292 = vpop.permute.xlu0 %291
    %294 = vset.pattern.permute.xlu0 2
    %295 = vperm.xlu0 %294, %v227
    %v296 = vpop.permute.xlu0 %295
    %298 = vset.pattern.permute.xlu0 2
    %299 = vperm.xlu0 %298, %v228
    %v300 = vpop.permute.xlu0 %299
    %v302 = vlaneseq
    %v303 = vshrl.u32 %v302, 7
    %v304 = vsub.s32 2, %v303
    %v305 = vrot.slane %v229, %v304
    %v306 = vmul.f32 %v288, %v305
    %v307 = vmul.f32 %v292, %v305
    %v308 = vmul.f32 %v296, %v305
    %v309 = vmul.f32 %v300, %v305
    %v310 = vadd.f32 %v282, %v306
    %v311 = vadd.f32 %v283, %v307
    %v312 = vadd.f32 %v284, %v308
    %v313 = vadd.f32 %v285, %v309
    %v314 = vld [vmem:[#allocation7] sm:$0x1]
    %v316 = vlaneseq
    %v317 = vshrl.u32 %v316, 7
    %v318 = vsub.s32 0, %v317
    %v319 = vrot.slane %v314, %v318
    %v321 = vadd.f32 %v310, %v319
    %v322 = vadd.f32 %v311, %v319
    %v323 = vadd.f32 %v312, %v319
    %v324 = vadd.f32 %v313, %v319
    %v325 = vmax.f32 %v321, 0.0
    %v326 = vmax.f32 %v322, 0.0
    %v327 = vmax.f32 %v323, 0.0
    %v328 = vmax.f32 %v324, 0.0
    %v329 = vpack.c.bf16 %v326, %v325
    %v330 = vpack.c.bf16 %v328, %v327
    %v331 = vld [vmem:[#allocation8] sm:$0xf]
    %v332 = vld [vmem:[#allocation8 + $0x4] sm:$0xf]
    %v333 = vld [vmem:[#allocation8 + $0x8] sm:$0xf]
    %v334 = vld [vmem:[#allocation8 + $0xc] sm:$0xf]
    %v335 = vld [vmem:[#allocation8 + $0x10] sm:$0xf]
    %v336 = vld [vmem:[#allocation8 + $0x14] sm:$0xf]
    %v337 = vld [vmem:[#allocation8 + $0x18] sm:$0xf]
    %v338 = vld [vmem:[#allocation8 + $0x1c] sm:$0xf]
    %v339 = vld [vmem:[#allocation10] sm:$0x1]
    %v341 = vlaneseq
    %v342 = vshrl.u32 %v341, 7
    %v343 = vsub.s32 0, %v342
    %v344 = vrot.slane %v339, %v343
    %v354 = vunpack.c.l.b16 %v331
    %v355 = vunpack.c.l.b16 %v332
    %v356 = vunpack.c.l.b16 %v333
    %v357 = vunpack.c.l.b16 %v334
    %v358 = vunpack.c.l.b16 %v335
    %v359 = vunpack.c.l.b16 %v336
    %v360 = vunpack.c.l.b16 %v337
    %v361 = vunpack.c.l.b16 %v338
    %v362 = vpack.c.b16 %v355, %v354
    %v363 = vpack.c.b16 %v357, %v356
    %v364 = vpack.c.b16 %v359, %v358
    %v365 = vpack.c.b16 %v361, %v360
    %vm370 = vcmask 523264
    %v372 = vsel %vm370, %v329, 0
    %v375 = vsel %vm370, %v330, 0
    %377 = vmatprep.subr.bf16.mxu0 0
    %378 = vmatpush1.bf16.msra.mxu0 %v362
    %379 = vmatprep.subr.bf16.mxu0 0
    %380 = vmatpush1.bf16.msra.mxu0 %v363
    %381 = vmatprep.subr.bf16.mxu0 0
    %382 = vmatpush1.bf16.msra.mxu0 %v364
    %383 = vmatprep.subr.bf16.mxu0 0
    %384 = vmatpush1.bf16.msra.mxu0 %v365
    %385 = vmatprep.subr.bf16.mxu0 0
    %386 = vmatpush1.bf16.msra.mxu0 0
    %387 = vmatprep.subr.bf16.mxu0 0
    %388 = vmatpush1.bf16.msra.mxu0 0
    %389 = vmatprep.subr.bf16.mxu0 0
    %390 = vmatpush1.bf16.msra.mxu0 0
    %391 = vmatprep.subr.bf16.mxu0 0
    %392 = vmatpush1.bf16.msra.mxu0 0
    %393 = vmatprep.subr.bf16.mxu0 0
    %394 = vmatpush1.bf16.msra.mxu0 0
    %395 = vmatprep.subr.bf16.mxu0 0
    %396 = vmatpush1.bf16.msra.mxu0 0
    %397 = vmatprep.subr.bf16.mxu0 0
    %398 = vmatpush1.bf16.msra.mxu0 0
    %399 = vmatprep.subr.bf16.mxu0 0
    %400 = vmatpush1.bf16.msra.mxu0 0
    %401 = vmatprep.subr.bf16.mxu0 0
    %402 = vmatpush1.bf16.msra.mxu0 0
    %403 = vmatprep.subr.bf16.mxu0 0
    %404 = vmatpush1.bf16.msra.mxu0 0
    %405 = vmatprep.subr.bf16.mxu0 0
    %406 = vmatpush1.bf16.msra.mxu0 0
    %407 = vmatprep.subr.bf16.mxu0 0
    %408 = vmatpush1.bf16.msra.mxu0 0
    %409 = vmatprep.mubr.bf16.mxu0 0
    %410 = vmatmul.mubr.bf16.gmra.mrb[0].mxu0 %v372
    %v411 = vpop.f32.mrb[0].mxu0
    %v412 = vadd.f32 %v344, %v411
    %v413 = vpop.f32.mrb[0].mxu0
    %v414 = vpop.f32.mrb[0].mxu0
    %v415 = vadd.f32 %v344, %v414
    %v416 = vpop.f32.mrb[0].mxu0
    %417 = vmatprep.mubr.bf16.mxu0 0
    %418 = vmatmul.mubr.bf16.gmra.mrb[0].mxu0 %v375
    %v419 = vpop.f32.mrb[0].mxu0
    %v420 = vadd.f32 %v344, %v419
    %v421 = vpop.f32.mrb[0].mxu0
    %v422 = vpop.f32.mrb[0].mxu0
    %v423 = vadd.f32 %v344, %v422
    %v424 = vpop.f32.mrb[0].mxu0
    %425 = vdwg.mxu0
    %v426 = vmax.f32 %v412, 0.0
    %v427 = vmax.f32 %v415, 0.0
    %v428 = vmax.f32 %v420, 0.0
    %v429 = vmax.f32 %v423, 0.0
    %v430 = vpack.c.bf16 %v427, %v426
    %v431 = vpack.c.bf16 %v429, %v428
    %v432 = vld [vmem:[#allocation11] sm:$0xf]
    %v433 = vld [vmem:[#allocation11 + $0x4] sm:$0xf]
    %v434 = vld [vmem:[#allocation11 + $0x8] sm:$0xf]
    %v435 = vld [vmem:[#allocation11 + $0xc] sm:$0xf]
    %v436 = vld [vmem:[#allocation11 + $0x10] sm:$0xf]
    %v437 = vld [vmem:[#allocation11 + $0x14] sm:$0xf]
    %v438 = vld [vmem:[#allocation11 + $0x18] sm:$0xf]
    %v439 = vld [vmem:[#allocation11 + $0x1c] sm:$0xf]
    %v440 = vld [vmem:[#allocation11 + $0x20] sm:$0xf]
    %v441 = vld [vmem:[#allocation11 + $0x24] sm:$0xf]
    %v442 = vld [vmem:[#allocation11 + $0x28] sm:$0xf]
    %v443 = vld [vmem:[#allocation11 + $0x2c] sm:$0xf]
    %v444 = vld [vmem:[#allocation11 + $0x30] sm:$0xf]
    %v445 = vld [vmem:[#allocation11 + $0x34] sm:$0xf]
    %v446 = vld [vmem:[#allocation11 + $0x38] sm:$0xf]
    %v447 = vld [vmem:[#allocation11 + $0x3c] sm:$0xf]
    %v448 = vld [vmem:[#allocation13] sm:$0x1]
    %v450 = vlaneseq
    %v451 = vshrl.u32 %v450, 7
    %v452 = vsub.s32 0, %v451
    %v453 = vrot.slane %v448, %v452
    %v471 = vunpack.c.l.b16 %v432
    %v472 = vunpack.c.l.b16 %v433
    %v473 = vunpack.c.l.b16 %v434
    %v474 = vunpack.c.l.b16 %v435
    %v475 = vunpack.c.l.b16 %v436
    %v476 = vunpack.c.l.b16 %v437
    %v477 = vunpack.c.l.b16 %v438
    %v478 = vunpack.c.l.b16 %v439
    %v479 = vunpack.c.l.b16 %v440
    %v480 = vunpack.c.l.b16 %v441
    %v481 = vunpack.c.l.b16 %v442
    %v482 = vunpack.c.l.b16 %v443
    %v483 = vunpack.c.l.b16 %v444
    %v484 = vunpack.c.l.b16 %v445
    %v485 = vunpack.c.l.b16 %v446
    %v486 = vunpack.c.l.b16 %v447
    %v487 = vpack.c.b16 %v472, %v471
    %v488 = vpack.c.b16 %v474, %v473
    %v489 = vpack.c.b16 %v476, %v475
    %v490 = vpack.c.b16 %v478, %v477
    %v491 = vpack.c.b16 %v480, %v479
    %v492 = vpack.c.b16 %v482, %v481
    %v493 = vpack.c.b16 %v484, %v483
    %v494 = vpack.c.b16 %v486, %v485
    %503 = vmatprep.subr.bf16.mxu0 0
    %504 = vmatpush1.bf16.msra.mxu0 %v487
    %505 = vmatprep.subr.bf16.mxu0 0
    %506 = vmatpush1.bf16.msra.mxu0 %v488
    %507 = vmatprep.subr.bf16.mxu0 0
    %508 = vmatpush1.bf16.msra.mxu0 %v489
    %509 = vmatprep.subr.bf16.mxu0 0
    %510 = vmatpush1.bf16.msra.mxu0 %v490
    %511 = vmatprep.subr.bf16.mxu0 0
    %512 = vmatpush1.bf16.msra.mxu0 %v491
    %513 = vmatprep.subr.bf16.mxu0 0
    %514 = vmatpush1.bf16.msra.mxu0 %v492
    %515 = vmatprep.subr.bf16.mxu0 0
    %516 = vmatpush1.bf16.msra.mxu0 %v493
    %517 = vmatprep.subr.bf16.mxu0 0
    %518 = vmatpush1.bf16.msra.mxu0 %v494
    %519 = vmatprep.subr.bf16.mxu0 0
    %520 = vmatpush1.bf16.msra.mxu0 0
    %521 = vmatprep.subr.bf16.mxu0 0
    %522 = vmatpush1.bf16.msra.mxu0 0
    %523 = vmatprep.subr.bf16.mxu0 0
    %524 = vmatpush1.bf16.msra.mxu0 0
    %525 = vmatprep.subr.bf16.mxu0 0
    %526 = vmatpush1.bf16.msra.mxu0 0
    %527 = vmatprep.subr.bf16.mxu0 0
    %528 = vmatpush1.bf16.msra.mxu0 0
    %529 = vmatprep.subr.bf16.mxu0 0
    %530 = vmatpush1.bf16.msra.mxu0 0
    %531 = vmatprep.subr.bf16.mxu0 0
    %532 = vmatpush1.bf16.msra.mxu0 0
    %533 = vmatprep.subr.bf16.mxu0 0
    %534 = vmatpush1.bf16.msra.mxu0 0
    %535 = vmatprep.mubr.bf16.mxu0 0
    %536 = vmatmul.mubr.bf16.gmra.mrb[0].mxu0 %v430
    %v537 = vpop.f32.mrb[0].mxu0
    %v538 = vadd.f32 %v453, %v537
    %v539 = vpop.f32.mrb[0].mxu0
    %v540 = vpop.f32.mrb[0].mxu0
    %v541 = vadd.f32 %v453, %v540
    %v542 = vpop.f32.mrb[0].mxu0
    %543 = vmatprep.mubr.bf16.mxu0 0
    %544 = vmatmul.mubr.bf16.gmra.mrb[0].mxu0 %v431
    %v545 = vpop.f32.mrb[0].mxu0
    %v546 = vadd.f32 %v453, %v545
    %v547 = vpop.f32.mrb[0].mxu0
    %v548 = vpop.f32.mrb[0].mxu0
    %v549 = vadd.f32 %v453, %v548
    %v550 = vpop.f32.mrb[0].mxu0
    %551 = vdwg.mxu0
    %v552 = vmax.f32 %v538, 0.0
    %v553 = vmax.f32 %v541, 0.0
    %v554 = vmax.f32 %v546, 0.0
    %v555 = vmax.f32 %v549, 0.0
    %v556 = vmax.f32 %v552, %v553
    %v557 = vrot.slane %v556, 4
    %v558 = vmax.f32 %v556, %v557
    %v559 = vrot.slane %v558, 2
    %v560 = vmax.f32 %v558, %v559
    %v561 = vrot.slane %v560, 1
    %v562 = vmax.f32 %v560, %v561
    %v563 = vmax.f32 %v554, %v555
    %v564 = vrot.slane %v563, 4
    %v565 = vmax.f32 %v563, %v564
    %v566 = vrot.slane %v565, 2
    %v567 = vmax.f32 %v565, %v566
    %v568 = vrot.slane %v567, 1
    %v569 = vmax.f32 %v567, %v568
    %v570 = vpack.c.bf16 %v553, %v552
    %v571 = vpack.c.bf16 %v555, %v554
    %v572 = vld [vmem:[#allocation14] sm:$0xf]
    %v573 = vld [vmem:[#allocation14 + $0x4] sm:$0xf]
    %v574 = vld [vmem:[#allocation14 + $0x8] sm:$0xf]
    %v575 = vld [vmem:[#allocation14 + $0xc] sm:$0xf]
    %v576 = vld [vmem:[#allocation14 + $0x10] sm:$0xf]
    %v577 = vld [vmem:[#allocation14 + $0x14] sm:$0xf]
    %v578 = vld [vmem:[#allocation14 + $0x18] sm:$0xf]
    %v579 = vld [vmem:[#allocation14 + $0x1c] sm:$0xf]
    %v580 = vld [vmem:[#allocation14 + $0x20] sm:$0xf]
    %v581 = vld [vmem:[#allocation14 + $0x24] sm:$0xf]
    %v582 = vld [vmem:[#allocation14 + $0x28] sm:$0xf]
    %v583 = vld [vmem:[#allocation14 + $0x2c] sm:$0xf]
    %v584 = vld [vmem:[#allocation14 + $0x30] sm:$0xf]
    %v585 = vld [vmem:[#allocation14 + $0x34] sm:$0xf]
    %v586 = vld [vmem:[#allocation14 + $0x38] sm:$0xf]
    %v587 = vld [vmem:[#allocation14 + $0x3c] sm:$0xf]
    %v604 = vunpack.c.l.b16 %v572
    %v605 = vunpack.c.l.b16 %v573
    %v606 = vunpack.c.l.b16 %v574
    %v607 = vunpack.c.l.b16 %v575
    %v608 = vunpack.c.l.b16 %v576
    %v609 = vunpack.c.l.b16 %v577
    %v610 = vunpack.c.l.b16 %v578
    %v611 = vunpack.c.l.b16 %v579
    %v612 = vunpack.c.l.b16 %v580
    %v613 = vunpack.c.l.b16 %v581
    %v614 = vunpack.c.l.b16 %v582
    %v615 = vunpack.c.l.b16 %v583
    %v616 = vunpack.c.l.b16 %v584
    %v617 = vunpack.c.l.b16 %v585
    %v618 = vunpack.c.l.b16 %v586
    %v619 = vunpack.c.l.b16 %v587
    %v620 = vpack.c.b16 %v605, %v604
    %v621 = vpack.c.b16 %v607, %v606
    %v622 = vpack.c.b16 %v609, %v608
    %v623 = vpack.c.b16 %v611, %v610
    %v624 = vpack.c.b16 %v613, %v612
    %v625 = vpack.c.b16 %v615, %v614
    %v626 = vpack.c.b16 %v617, %v616
    %v627 = vpack.c.b16 %v619, %v618
    %636 = vmatprep.subr.bf16.mxu0 0
    %637 = vmatpush1.bf16.msra.mxu0 %v620
    %638 = vmatprep.subr.bf16.mxu0 0
    %639 = vmatpush1.bf16.msra.mxu0 %v621
    %640 = vmatprep.subr.bf16.mxu0 0
    %641 = vmatpush1.bf16.msra.mxu0 %v622
    %642 = vmatprep.subr.bf16.mxu0 0
    %643 = vmatpush1.bf16.msra.mxu0 %v623
    %644 = vmatprep.subr.bf16.mxu0 0
    %645 = vmatpush1.bf16.msra.mxu0 %v624
    %646 = vmatprep.subr.bf16.mxu0 0
    %647 = vmatpush1.bf16.msra.mxu0 %v625
    %648 = vmatprep.subr.bf16.mxu0 0
    %649 = vmatpush1.bf16.msra.mxu0 %v626
    %650 = vmatprep.subr.bf16.mxu0 0
    %651 = vmatpush1.bf16.msra.mxu0 %v627
    %652 = vmatprep.subr.bf16.mxu0 0
    %653 = vmatpush1.bf16.msra.mxu0 0
    %654 = vmatprep.subr.bf16.mxu0 0
    %655 = vmatpush1.bf16.msra.mxu0 0
    %656 = vmatprep.subr.bf16.mxu0 0
    %657 = vmatpush1.bf16.msra.mxu0 0
    %658 = vmatprep.subr.bf16.mxu0 0
    %659 = vmatpush1.bf16.msra.mxu0 0
    %660 = vmatprep.subr.bf16.mxu0 0
    %661 = vmatpush1.bf16.msra.mxu0 0
    %662 = vmatprep.subr.bf16.mxu0 0
    %663 = vmatpush1.bf16.msra.mxu0 0
    %664 = vmatprep.subr.bf16.mxu0 0
    %665 = vmatpush1.bf16.msra.mxu0 0
    %666 = vmatprep.subr.bf16.mxu0 0
    %667 = vmatpush1.bf16.msra.mxu0 0
    %668 = vmatprep.mubr.bf16.mxu0 0
    %669 = vmatmul.mubr.bf16.gmra.mrb[0].mxu0 %v570
    %v670 = vpop.f32.mrb[0].mxu0
    %v671 = vadd.f32 0.0, %v670
    %v672 = vpop.f32.mrb[0].mxu0
    %v673 = vpop.f32.mrb[0].mxu0
    %v674 = vadd.f32 0.0, %v673
    %v675 = vpop.f32.mrb[0].mxu0
    %676 = vmatprep.mubr.bf16.mxu0 0
    %677 = vmatmul.mubr.bf16.gmra.mrb[0].mxu0 %v571
    %v678 = vpop.f32.mrb[0].mxu0
    %v679 = vadd.f32 0.0, %v678
    %v680 = vpop.f32.mrb[0].mxu0
    %v681 = vpop.f32.mrb[0].mxu0
    %v682 = vadd.f32 0.0, %v681
    %v683 = vpop.f32.mrb[0].mxu0
    %684 = vdwg.mxu0
    %v685 = vpack.c.bf16 %v562, %v562
    %v686 = vpack.c.bf16 %v569, %v569
    %v687 = vld [vmem:[#allocation16] sm:$0xf]
    %v688 = vld [vmem:[#allocation16 + $0x4] sm:$0xf]
    %v689 = vld [vmem:[#allocation16 + $0x8] sm:$0xf]
    %v690 = vld [vmem:[#allocation16 + $0xc] sm:$0xf]
    %v691 = vld [vmem:[#allocation16 + $0x10] sm:$0xf]
    %v692 = vld [vmem:[#allocation16 + $0x14] sm:$0xf]
    %v693 = vld [vmem:[#allocation16 + $0x18] sm:$0xf]
    %v694 = vld [vmem:[#allocation16 + $0x1c] sm:$0xf]
    %v695 = vld [vmem:[#allocation16 + $0x20] sm:$0xf]
    %v696 = vld [vmem:[#allocation16 + $0x24] sm:$0xf]
    %v697 = vld [vmem:[#allocation16 + $0x28] sm:$0xf]
    %v698 = vld [vmem:[#allocation16 + $0x2c] sm:$0xf]
    %v699 = vld [vmem:[#allocation16 + $0x30] sm:$0xf]
    %v700 = vld [vmem:[#allocation16 + $0x34] sm:$0xf]
    %v701 = vld [vmem:[#allocation16 + $0x38] sm:$0xf]
    %v702 = vld [vmem:[#allocation16 + $0x3c] sm:$0xf]
    %v705 = vunpack.c.l.b16 %v685
    %v706 = vunpack.c.l.b16 %v686
    %vm707 = vcmask 1041409
    %v708 = vsel %vm707, %v706, %v705
    %v709 = vpack.c.b16 %v708, %v708
    %v727 = vunpack.c.l.b16 %v687
    %v728 = vunpack.c.l.b16 %v688
    %v729 = vunpack.c.l.b16 %v689
    %v730 = vunpack.c.l.b16 %v690
    %v731 = vunpack.c.l.b16 %v691
    %v732 = vunpack.c.l.b16 %v692
    %v733 = vunpack.c.l.b16 %v693
    %v734 = vunpack.c.l.b16 %v694
    %v735 = vunpack.c.l.b16 %v695
    %v736 = vunpack.c.l.b16 %v696
    %v737 = vunpack.c.l.b16 %v697
    %v738 = vunpack.c.l.b16 %v698
    %v739 = vunpack.c.l.b16 %v699
    %v740 = vunpack.c.l.b16 %v700
    %v741 = vunpack.c.l.b16 %v701
    %v742 = vunpack.c.l.b16 %v702
    %v743 = vpack.c.b16 %v728, %v727
    %v744 = vpack.c.b16 %v730, %v729
    %v745 = vpack.c.b16 %v732, %v731
    %v746 = vpack.c.b16 %v734, %v733
    %v747 = vpack.c.b16 %v736, %v735
    %v748 = vpack.c.b16 %v738, %v737
    %v749 = vpack.c.b16 %v740, %v739
    %v750 = vpack.c.b16 %v742, %v741
    %759 = vmatprep.subr.bf16.mxu0 0
    %760 = vmatpush1.bf16.msra.mxu0 %v743
    %761 = vmatprep.subr.bf16.mxu0 0
    %762 = vmatpush1.bf16.msra.mxu0 %v744
    %763 = vmatprep.subr.bf16.mxu0 0
    %764 = vmatpush1.bf16.msra.mxu0 %v745
    %765 = vmatprep.subr.bf16.mxu0 0
    %766 = vmatpush1.bf16.msra.mxu0 %v746
    %767 = vmatprep.subr.bf16.mxu0 0
    %768 = vmatpush1.bf16.msra.mxu0 %v747
    %769 = vmatprep.subr.bf16.mxu0 0
    %770 = vmatpush1.bf16.msra.mxu0 %v748
    %771 = vmatprep.subr.bf16.mxu0 0
    %772 = vmatpush1.bf16.msra.mxu0 %v749
    %773 = vmatprep.subr.bf16.mxu0 0
    %774 = vmatpush1.bf16.msra.mxu0 %v750
    %775 = vmatprep.subr.bf16.mxu0 0
    %776 = vmatpush1.bf16.msra.mxu0 0
    %777 = vmatprep.subr.bf16.mxu0 0
    %778 = vmatpush1.bf16.msra.mxu0 0
    %779 = vmatprep.subr.bf16.mxu0 0
    %780 = vmatpush1.bf16.msra.mxu0 0
    %781 = vmatprep.subr.bf16.mxu0 0
    %782 = vmatpush1.bf16.msra.mxu0 0
    %783 = vmatprep.subr.bf16.mxu0 0
    %784 = vmatpush1.bf16.msra.mxu0 0
    %785 = vmatprep.subr.bf16.mxu0 0
    %786 = vmatpush1.bf16.msra.mxu0 0
    %787 = vmatprep.subr.bf16.mxu0 0
    %788 = vmatpush1.bf16.msra.mxu0 0
    %789 = vmatprep.subr.bf16.mxu0 0
    %790 = vmatpush1.bf16.msra.mxu0 0
    %791 = vmatprep.mubr.bf16.mxu0 0
    %792 = vmatmul.mubr.bf16.gmra.mrb[0].mxu0 %v709
    %v793 = vpop.f32.mrb[0].mxu0
    %v794 = vadd.f32 0.0, %v793
    %v795 = vpop.f32.mrb[0].mxu0
    %v796 = vpop.f32.mrb[0].mxu0
    %v797 = vpop.f32.mrb[0].mxu0
    %798 = vdwg.mxu0
    %v801 = vunpack.c.l.s4 1966171168
    %v802 = vunpack.c.0.s8 %v801
    %v803 = vlaneseq
    %v804 = vshrl.u32 %v803, 7
    %v805 = vsub.s32 %v802, %v804
    %v806 = vrot.slane %v794, %v805
    %v807 = vcombine.high %v806, %v806
    %v809 = vunpack.c.l.s4 1966171168
    %v810 = vunpack.c.0.s8 %v809
    %v811 = vlaneseq
    %v812 = vshrl.u32 %v811, 7
    %v813 = vsub.s32 %v810, %v812
    %v814 = vrot.slane %v806, %v813
    %v816 = vunpack.c.l.s4 1966171168
    %v817 = vunpack.c.0.s8 %v816
    %v818 = vlaneseq
    %v819 = vshrl.u32 %v818, 7
    %v820 = vsub.s32 %v817, %v819
    %v821 = vrot.slane %v807, %v820
    %v822 = vlaneseq
    %v823 = vshrl.u32 %v822, 7
    %v824 = vsub.s32 0, %v823
    %v825 = vrot.slane %v814, %v824
    %v826 = vlaneseq
    %v827 = vshrl.u32 %v826, 7
    %v828 = vsub.s32 0, %v827
    %v829 = vrot.slane %v821, %v828
    %v832 = vadd.f32 %v671, %v825
    %v833 = vadd.f32 %v674, %v825
    %v834 = vadd.f32 %v679, %v829
    %v835 = vadd.f32 %v682, %v829
    %v836 = vld [vmem:[#allocation17] sm:$0x1]
    %v838 = vlaneseq
    %v839 = vshrl.u32 %v838, 7
    %v840 = vsub.s32 0, %v839
    %v841 = vrot.slane %v836, %v840
    %v843 = vadd.f32 %v832, %v841
    %v844 = vadd.f32 %v833, %v841
    %v845 = vadd.f32 %v834, %v841
    %v846 = vadd.f32 %v835, %v841
    %v847 = vmax.f32 %v843, 0.0
    %v848 = vmax.f32 %v844, 0.0
    %v849 = vmax.f32 %v845, 0.0
    %v850 = vmax.f32 %v846, 0.0
    %v851 = vpack.c.bf16 %v848, %v847
    %v852 = vpack.c.bf16 %v850, %v849
    %v853 = vld [vmem:[#allocation19] sm:$0xf]
    %v854 = vld [vmem:[#allocation19 + $0x4] sm:$0xf]
    %v855 = vld [vmem:[#allocation19 + $0x8] sm:$0xf]
    %v856 = vld [vmem:[#allocation19 + $0xc] sm:$0xf]
    %v857 = vld [vmem:[#allocation19 + $0x10] sm:$0xf]
    %v858 = vld [vmem:[#allocation19 + $0x14] sm:$0xf]
    %v859 = vld [vmem:[#allocation19 + $0x18] sm:$0xf]
    %v860 = vld [vmem:[#allocation19 + $0x1c] sm:$0xf]
    %v861 = vld [vmem:[#allocation19 + $0x20] sm:$0xf]
    %v862 = vld [vmem:[#allocation19 + $0x24] sm:$0xf]
    %v863 = vld [vmem:[#allocation19 + $0x28] sm:$0xf]
    %v864 = vld [vmem:[#allocation19 + $0x2c] sm:$0xf]
    %v865 = vld [vmem:[#allocation19 + $0x30] sm:$0xf]
    %v866 = vld [vmem:[#allocation19 + $0x34] sm:$0xf]
    %v867 = vld [vmem:[#allocation19 + $0x38] sm:$0xf]
    %v868 = vld [vmem:[#allocation19 + $0x3c] sm:$0xf]
    %v869 = vld [vmem:[#allocation20] sm:$0x1]
    %v871 = vlaneseq
    %v872 = vshrl.u32 %v871, 7
    %v873 = vsub.s32 0, %v872
    %v874 = vrot.slane %v869, %v873
    %v892 = vunpack.c.l.b16 %v853
    %v893 = vunpack.c.l.b16 %v854
    %v894 = vunpack.c.l.b16 %v855
    %v895 = vunpack.c.l.b16 %v856
    %v896 = vunpack.c.l.b16 %v857
    %v897 = vunpack.c.l.b16 %v858
    %v898 = vunpack.c.l.b16 %v859
    %v899 = vunpack.c.l.b16 %v860
    %v900 = vunpack.c.l.b16 %v861
    %v901 = vunpack.c.l.b16 %v862
    %v902 = vunpack.c.l.b16 %v863
    %v903 = vunpack.c.l.b16 %v864
    %v904 = vunpack.c.l.b16 %v865
    %v905 = vunpack.c.l.b16 %v866
    %v906 = vunpack.c.l.b16 %v867
    %v907 = vunpack.c.l.b16 %v868
    %v908 = vpack.c.b16 %v893, %v892
    %v909 = vpack.c.b16 %v895, %v894
    %v910 = vpack.c.b16 %v897, %v896
    %v911 = vpack.c.b16 %v899, %v898
    %v912 = vpack.c.b16 %v901, %v900
    %v913 = vpack.c.b16 %v903, %v902
    %v914 = vpack.c.b16 %v905, %v904
    %v915 = vpack.c.b16 %v907, %v906
    %924 = vmatprep.subr.bf16.mxu0 0
    %925 = vmatpush1.bf16.msra.mxu0 %v908
    %926 = vmatprep.subr.bf16.mxu0 0
    %927 = vmatpush1.bf16.msra.mxu0 %v909
    %928 = vmatprep.subr.bf16.mxu0 0
    %929 = vmatpush1.bf16.msra.mxu0 %v910
    %930 = vmatprep.subr.bf16.mxu0 0
    %931 = vmatpush1.bf16.msra.mxu0 %v911
    %932 = vmatprep.subr.bf16.mxu0 0
    %933 = vmatpush1.bf16.msra.mxu0 %v912
    %934 = vmatprep.subr.bf16.mxu0 0
    %935 = vmatpush1.bf16.msra.mxu0 %v913
    %936 = vmatprep.subr.bf16.mxu0 0
    %937 = vmatpush1.bf16.msra.mxu0 %v914
    %938 = vmatprep.subr.bf16.mxu0 0
    %939 = vmatpush1.bf16.msra.mxu0 %v915
    %940 = vmatprep.subr.bf16.mxu0 0
    %941 = vmatpush1.bf16.msra.mxu0 0
    %942 = vmatprep.subr.bf16.mxu0 0
    %943 = vmatpush1.bf16.msra.mxu0 0
    %944 = vmatprep.subr.bf16.mxu0 0
    %945 = vmatpush1.bf16.msra.mxu0 0
    %946 = vmatprep.subr.bf16.mxu0 0
    %947 = vmatpush1.bf16.msra.mxu0 0
    %948 = vmatprep.subr.bf16.mxu0 0
    %949 = vmatpush1.bf16.msra.mxu0 0
    %950 = vmatprep.subr.bf16.mxu0 0
    %951 = vmatpush1.bf16.msra.mxu0 0
    %952 = vmatprep.subr.bf16.mxu0 0
    %953 = vmatpush1.bf16.msra.mxu0 0
    %954 = vmatprep.subr.bf16.mxu0 0
    %955 = vmatpush1.bf16.msra.mxu0 0
    %956 = vmatprep.mubr.bf16.mxu0 0
    %957 = vmatmul.mubr.bf16.gmra.mrb[0].mxu0 %v851
    %v958 = vpop.f32.mrb[0].mxu0
    %v959 = vadd.f32 %v874, %v958
    %v960 = vpop.f32.mrb[0].mxu0
    %v961 = vpop.f32.mrb[0].mxu0
    %v962 = vadd.f32 %v874, %v961
    %v963 = vpop.f32.mrb[0].mxu0
    %964 = vmatprep.mubr.bf16.mxu0 0
    %965 = vmatmul.mubr.bf16.gmra.mrb[0].mxu0 %v852
    %v966 = vpop.f32.mrb[0].mxu0
    %v967 = vadd.f32 %v874, %v966
    %v968 = vpop.f32.mrb[0].mxu0
    %v969 = vpop.f32.mrb[0].mxu0
    %v970 = vadd.f32 %v874, %v969
    %v971 = vpop.f32.mrb[0].mxu0
    %972 = vdwg.mxu0
    %v973 = vmax.f32 %v959, 0.0
    %v974 = vmax.f32 %v962, 0.0
    %v975 = vmax.f32 %v967, 0.0
    %v976 = vmax.f32 %v970, 0.0
    %v977 = vpack.c.bf16 %v974, %v973
    %v978 = vpack.c.bf16 %v976, %v975
    %v979 = vld [vmem:[#allocation22] sm:$0xf]
    %v980 = vld [vmem:[#allocation22 + $0x4] sm:$0xf]
    %v981 = vld [vmem:[#allocation22 + $0x8] sm:$0xf]
    %v982 = vld [vmem:[#allocation22 + $0xc] sm:$0xf]
    %v983 = vld [vmem:[#allocation22 + $0x10] sm:$0xf]
    %v984 = vld [vmem:[#allocation22 + $0x14] sm:$0xf]
    %v985 = vld [vmem:[#allocation22 + $0x18] sm:$0xf]
    %v986 = vld [vmem:[#allocation22 + $0x1c] sm:$0xf]
    %v987 = vld [vmem:[#allocation23] sm:$0x1]
    %v989 = vlaneseq
    %v990 = vshrl.u32 %v989, 7
    %v991 = vsub.s32 0, %v990
    %v992 = vrot.slane %v987, %v991
    %v1002 = vunpack.c.l.b16 %v979
    %v1003 = vunpack.c.l.b16 %v980
    %v1004 = vunpack.c.l.b16 %v981
    %v1005 = vunpack.c.l.b16 %v982
    %v1006 = vunpack.c.l.b16 %v983
    %v1007 = vunpack.c.l.b16 %v984
    %v1008 = vunpack.c.l.b16 %v985
    %v1009 = vunpack.c.l.b16 %v986
    %v1010 = vpack.c.b16 %v1003, %v1002
    %v1011 = vpack.c.b16 %v1005, %v1004
    %v1012 = vpack.c.b16 %v1007, %v1006
    %v1013 = vpack.c.b16 %v1009, %v1008
    %v1019 = vsel %vm370, %v977, 0
    %v1022 = vsel %vm370, %v978, 0
    %1024 = vmatprep.subr.bf16.mxu0 0
    %1025 = vmatpush1.bf16.msra.mxu0 %v1010
    %1026 = vmatprep.subr.bf16.mxu0 0
    %1027 = vmatpush1.bf16.msra.mxu0 %v1011
    %1028 = vmatprep.subr.bf16.mxu0 0
    %1029 = vmatpush1.bf16.msra.mxu0 %v1012
    %1030 = vmatprep.subr.bf16.mxu0 0
    %1031 = vmatpush1.bf16.msra.mxu0 %v1013
    %1032 = vmatprep.subr.bf16.mxu0 0
    %1033 = vmatpush1.bf16.msra.mxu0 0
    %1034 = vmatprep.subr.bf16.mxu0 0
    %1035 = vmatpush1.bf16.msra.mxu0 0
    %1036 = vmatprep.subr.bf16.mxu0 0
    %1037 = vmatpush1.bf16.msra.mxu0 0
    %1038 = vmatprep.subr.bf16.mxu0 0
    %1039 = vmatpush1.bf16.msra.mxu0 0
    %1040 = vmatprep.subr.bf16.mxu0 0
    %1041 = vmatpush1.bf16.msra.mxu0 0
    %1042 = vmatprep.subr.bf16.mxu0 0
    %1043 = vmatpush1.bf16.msra.mxu0 0
    %1044 = vmatprep.subr.bf16.mxu0 0
    %1045 = vmatpush1.bf16.msra.mxu0 0
    %1046 = vmatprep.subr.bf16.mxu0 0
    %1047 = vmatpush1.bf16.msra.mxu0 0
    %1048 = vmatprep.subr.bf16.mxu0 0
    %1049 = vmatpush1.bf16.msra.mxu0 0
    %1050 = vmatprep.subr.bf16.mxu0 0
    %1051 = vmatpush1.bf16.msra.mxu0 0
    %1052 = vmatprep.subr.bf16.mxu0 0
    %1053 = vmatpush1.bf16.msra.mxu0 0
    %1054 = vmatprep.subr.bf16.mxu0 0
    %1055 = vmatpush1.bf16.msra.mxu0 0
    %1056 = vmatprep.mubr.bf16.mxu0 0
    %1057 = vmatmul.mubr.bf16.gmra.mrb[0].mxu0 %v1019
    %v1058 = vpop.f32.mrb[0].mxu0
    %v1059 = vadd.f32 %v992, %v1058
    %v1060 = vpop.f32.mrb[0].mxu0
    %v1061 = vpop.f32.mrb[0].mxu0
    %v1062 = vadd.f32 %v992, %v1061
    %v1063 = vpop.f32.mrb[0].mxu0
    %1064 = vmatprep.mubr.bf16.mxu0 0
    %1065 = vmatmul.mubr.bf16.gmra.mrb[0].mxu0 %v1022
    %v1066 = vpop.f32.mrb[0].mxu0
    %v1067 = vadd.f32 %v992, %v1066
    %v1068 = vpop.f32.mrb[0].mxu0
    %v1069 = vpop.f32.mrb[0].mxu0
    %v1070 = vadd.f32 %v992, %v1069
    %v1071 = vpop.f32.mrb[0].mxu0
    %1072 = vdwg.mxu0
    %1073 = vmax.xlane.f32.xlu0 %v1059
    %v1074 = vpop.xlane.xlu0 %1073
    %1075 = vmax.xlane.f32.xlu0 %v1062
    %v1076 = vpop.xlane.xlu0 %1075
    %1077 = vmax.xlane.f32.xlu0 %v1067
    %v1078 = vpop.xlane.xlu0 %1077
    %1079 = vmax.xlane.f32.xlu0 %v1070
    %v1080 = vpop.xlane.xlu0 %1079
    %v1081 = vsub.f32 %v1059, %v1074
    %v1082 = vsub.f32 %v1062, %v1076
    %v1083 = vsub.f32 %v1067, %v1078
    %v1084 = vsub.f32 %v1070, %v1080
    %v1085 = vmul.f32 %v1081, 1.442695
    %v1086 = vpow.pop %v1085
    %v1087 = vmul.f32 %v1082, 1.442695
    %v1088 = vpow.pop %v1087
    %v1089 = vmul.f32 %v1083, 1.442695
    %v1090 = vpow.pop %v1089
    %v1091 = vmul.f32 %v1084, 1.442695
    %v1092 = vpow.pop %v1091
    %1093 = vadd.xlane.f32.xlu0 %v1086
    %v1094 = vpop.xlane.xlu0 %1093
    %1095 = vadd.xlane.f32.xlu0 %v1088
    %v1096 = vpop.xlane.xlu0 %1095
    %1097 = vadd.xlane.f32.xlu0 %v1090
    %v1098 = vpop.xlane.xlu0 %1097
    %1099 = vadd.xlane.f32.xlu0 %v1092
    %v1100 = vpop.xlane.xlu0 %1099
    %v1101 = vlog2.pop %v1094
    %v1102 = vmul.f32 %v1101, 0.6931472
    %v1103 = vlog2.pop %v1096
    %v1104 = vmul.f32 %v1103, 0.6931472
    %v1105 = vlog2.pop %v1098
    %v1106 = vmul.f32 %v1105, 0.6931472
    %v1107 = vlog2.pop %v1100
    %v1108 = vmul.f32 %v1107, 0.6931472
    %v1109 = vsub.f32 %v1081, %v1102
    %v1110 = vsub.f32 %v1082, %v1104
    %v1111 = vsub.f32 %v1083, %v1106
    %v1112 = vsub.f32 %v1084, %v1108
    %1113 = vst [vmem:[#allocation25] sm:$0xff] %v1109
    %1114 = vst [vmem:[#allocation25 + $0x8] sm:$0xff] %v1110
    %1115 = vst [vmem:[#allocation25 + $0x10] sm:$0xff] %v1111
    %1116 = vst [vmem:[#allocation25 + $0x18] sm:$0xff] %v1112
    // Predicated region
    $region114: #{pn_linear_forward.1} parent=1 // pred_check
      _
    $region115: #{pn_linear_forward.1} parent=1 // pred_check_branch
      %1118 = sbr.rel (0) target = $region117
    $region116: #{pn_linear_forward.1} parent=1 // pred_region
      %s1120 = ssub.s32 512, 512
      %1121 = vsyncadd [#allocation4], %s1120
      %s1122 = sshll.u32 [#allocation25], 4
      %s1123 = int_to_ptr.vmem [resolvable:$true] %s1122
      %1128 = dma.vmem_to_hbm [thread:$0]  %s1123, 512, %s14, [#allocation4], 128, 128, 8
    $region117: #{pn_linear_forward.1} parent=1 // pred_fallthru
      _
    // Predicated region
    $region118: #{pn_linear_forward.1} parent=1 // pred_check
      _
    $region119: #{pn_linear_forward.1} parent=1 // pred_check_branch
      %1130 = sbr.rel (0) target = $region121
    $region120: #{pn_linear_forward.1} parent=1 // pred_region
      %1131 = dma.done [#allocation4], 512
    $region121: #{pn_linear_forward.1} parent=1 // pred_fallthru
      _
    %1132 = vsyncpa [#allocation3], 1
    %1133 = vsyncpa [#allocation6], 1
    %1134 = vsyncpa [#allocation9], 1
    %1135 = vsyncpa [#allocation12], 1
    %1136 = vsyncpa [#allocation15], 1
    %1137 = vsyncpa [#allocation18], 1
    %1138 = vsyncpa [#allocation21], 1
    %1139 = vsyncpa [#allocation24], 1
    %1140 = vsyncpa [#allocation4], 1

</llo_original>
